<compile_context>
chip_gen: v6e
topology: v6e:2x2x1
jax: 0.10.0
libtpu: 0.0.40
codegen_flags: <defaults>
</compile_context>

<pallas_src>
from functools import partial

import jax
import jax.numpy as jnp
from jax.experimental import pallas as pl
from jax.experimental.pallas import tpu as pltpu


def _round_up(x, m):
    return (x + m - 1) // m * m


# ---------------------------------------------------------------------------
# Kernels
# ---------------------------------------------------------------------------

def _ddconv_roll_kernel(x_ref, wb_ref, o_ref, *, apply_gelu):
    """Lane-aligned path (L % 128 == 0).

    x_ref:  (nt, C, L)  input block (batch-tiled, channel/length full)
    wb_ref: (C, 4)      resident per-channel [w_left, w_center, w_right, bias] (f32)
    o_ref:  (nt, C, L)
    """
    x = x_ref[...].astype(jnp.float32)          # one upcast per tile (v5e-safe)
    wb = wb_ref[...]
    w_l = wb[:, 0:1][None]                      # (1, C, 1)
    w_c = wb[:, 1:2][None]
    w_r = wb[:, 2:3][None]
    b = wb[:, 3:4][None]

    L = x.shape[-1]
    # Circular taps on the XLU; wraparound is removed with a 2-column fix-up below
    # (cheaper on the VALU slot than full-tile iota/where masks).
    y = (w_l * pltpu.roll(x, shift=1, axis=2)
         + w_c * x
         + w_r * pltpu.roll(x, shift=L - 1, axis=2)
         + b)

    # Pre-activation edge corrections (column 0 wrongly saw x[L-1], column L-1 saw x[0]).
    c0 = y[:, :, 0:1] - w_l * x[:, :, L - 1:L]
    cL = y[:, :, L - 1:L] - w_r * x[:, :, 0:1]

    if apply_gelu:
        y = jax.nn.gelu(y, approximate=True)    # tanh form -> EUP slot
        c0 = jax.nn.gelu(c0, approximate=True)
        cL = jax.nn.gelu(cL, approximate=True)

    o_ref[...] = y.astype(o_ref.dtype)
    o_ref[:, :, 0:1] = c0.astype(o_ref.dtype)
    o_ref[:, :, L - 1:L] = cL.astype(o_ref.dtype)


def _ddconv_padded_kernel(x_ref, wb_ref, o_ref, *, apply_gelu):
    """Fallback for lane-unaligned (tiny) L: lane axis pre-padded with one leading
    zero column (plus trailing zeros) so the 3 taps are plain slices at 0, 1, 2.

    x_ref:  (nt, C, Lp)  col 0 = 0, cols 1..L = x, cols > L = 0
    wb_ref: (C, 4)
    o_ref:  (nt, C, L)
    """
    L = o_ref.shape[-1]
    x = x_ref[...].astype(jnp.float32)
    wb = wb_ref[...]
    w_l = wb[:, 0:1][None]
    w_c = wb[:, 1:2][None]
    w_r = wb[:, 2:3][None]
    b = wb[:, 3:4][None]

    y = (w_l * x[:, :, 0:L]
         + w_c * x[:, :, 1:L + 1]
         + w_r * x[:, :, 2:L + 2]
         + b)
    if apply_gelu:
        y = jax.nn.gelu(y, approximate=True)
    o_ref[...] = y.astype(o_ref.dtype)


# ---------------------------------------------------------------------------
# Wrapper
# ---------------------------------------------------------------------------

def ddconv(x, weight, bias, *, apply_gelu=False, buf_budget_bytes=4 << 20):
    """Depthwise Conv1d (kernel=3, stride=1, padding=1, groups=C) + bias,
    optionally fused with the GELU that follows it in WACN's Mlp.

    x:      (N, C, L)
    weight: (C, 3)  (PyTorch weight (C, 1, 3) squeezed; (C,1,3) also accepted)
    bias:   (C,)
    returns (N, C, L)
    """
    N, C, L = x.shape
    itemsize = jnp.dtype(x.dtype).itemsize

    # Fused per-channel [w0, w1, w2, bias] -> one tiny resident operand.
    wb = jnp.concatenate(
        [weight.reshape(C, 3), bias.reshape(C, 1)], axis=1).astype(jnp.float32)

    aligned = (L % 128 == 0)
    if aligned:
        # Fast path: no host padding, lane-dense blocks, roll + 2-column fix-up.
        x_in = x
        lblk = L
        kern = partial(_ddconv_roll_kernel, apply_gelu=apply_gelu)
    else:
        # Tiny / unaligned L: pad the lane axis once so the tap slices sit at 0, 1, 2.
        # TODO(synk): for *large* unaligned L, tile the lane axis with a 1-element halo
        # instead of this extra HBM pass.
        lblk = _round_up(L + 2, 128)
        x_in = jnp.pad(x, ((0, 0), (0, 0), (1, lblk - 1 - L)))
        kern = partial(_ddconv_padded_kernel, apply_gelu=apply_gelu)

    # Batch tile: biggest nt whose in+out slabs fit the byte budget, but capped so the
    # grid has >= 2 steps when N >= 2 (v7x has 2 TensorCores; also needed for the
    # BlockSpec pipeline to overlap DMA with compute at all).
    bytes_per_batch = C * (lblk + L) * itemsize
    nt = max(1, buf_budget_bytes // max(bytes_per_batch, 1))
    if N >= 2:
        nt = min(nt, -(-N // 2))          # ceil(N / 2)
    nt = min(nt, N)
    grid = (pl.cdiv(N, nt),)

    # Explicit scoped-VMEM limit: 2x(in) + 2x(out) double buffers + resident wb.
    vmem_needed = (2 * nt * C * lblk * itemsize
                   + 2 * nt * C * L * itemsize
                   + 2 * C * 4 * 4)
    vmem_limit = int(min(max(vmem_needed + (2 << 20), 32 << 20), 64 << 20))

    return pl.pallas_call(
        kern,
        out_shape=jax.ShapeDtypeStruct((N, C, L), x.dtype),
        grid_spec=pltpu.PrefetchScalarGridSpec(
            num_scalar_prefetch=0,
            grid=grid,
            in_specs=[
                pl.BlockSpec((nt, C, lblk), lambda n: (n, 0, 0)),
                pl.BlockSpec((C, 4), lambda n: (0, 0)),   # resident: same block each step
            ],
            out_specs=pl.BlockSpec((nt, C, L), lambda n: (n, 0, 0)),
        ),
        compiler_params=pltpu.CompilerParams(
            dimension_semantics=("parallel",),
            vmem_limit_bytes=vmem_limit),
    )(x_in, wb)


def ddconv_reference(x, weight, bias):
    # Pure-JAX reference: grouped (depthwise) 1D convolution + bias.
    N, C, L = x.shape
    w = weight.reshape(C, 1, 3)  # (out_ch, in_ch/groups, k)
    y = jax.lax.conv_general_dilated(
        x, w,
        window_strides=(1,),
        padding=((1, 1),),
        dimension_numbers=("NCH", "OIH", "NCH"),
        feature_group_count=C,
    )
    return y + bias.reshape(1, C, 1)


if __name__ == "__main__":
    key = jax.random.PRNGKey(0)
    kx, kw, kb, kx2 = jax.random.split(key, 4)

    # PyTorch Conv1d default init: U(-sqrt(k), sqrt(k)), k = groups/(in_ch*ks) = 1/3.
    bound = (1.0 / 3.0) ** 0.5

    # Case 1: lane-aligned length (roll path), 2-step parallel grid.
    N, C, L = 2, 16, 128
    x = jax.random.normal(kx, (N, C, L), dtype=jnp.float32)
    weight = jax.random.uniform(kw, (C, 3), minval=-bound, maxval=bound,
                                dtype=jnp.float32)
    bias = jax.random.uniform(kb, (C,), minval=-bound, maxval=bound,
                              dtype=jnp.float32)

    # Case 2: small, lane-unaligned length (padded fallback), small C.
    N2, C2, L2 = 2, 4, 16
    x_small = jax.random.normal(kx2, (N2, C2, L2), dtype=jnp.float32)

    # (input, weight, bias, apply_gelu)
    cases = [
        (x, weight, bias, False),
        (x, weight, bias, True),                       # fused conv + GELU (Mlp path)
        (x_small, weight[:C2], bias[:C2], False),
    ]

    for xi, wi, bi, fuse in cases:
        out = ddconv(xi, wi, bi, apply_gelu=fuse)
        out = jax.block_until_ready(out)
        ref = ddconv_reference(xi, wi, bi)
        if fuse:
            ref = jax.nn.gelu(ref, approximate=True)
        assert out.shape == xi.shape
        assert jnp.allclose(out, ref, atol=1e-5, rtol=1e-5), "mismatch vs reference"

    print("KERNEL_OK")
</pallas_src>

<mosaic_0001>
module attributes {stable_mosaic.version = 11 : i64} {
  func.func @_ddconv_roll_kernel(%arg0: i32, %arg1: memref<1x16x128xf32, #tpu.memory_space<vmem>>, %arg2: memref<16x4xf32, #tpu.memory_space<vmem>>, %arg3: memref<1x16x128xf32, #tpu.memory_space<vmem>>) attributes {dimension_semantics = [#tpu.dimension_semantics<parallel>], iteration_bounds = array<i64: 2>, scalar_prefetch = 0 : i64, scratch_operands = 0 : i64, tpu.core_type = #tpu.core_type<tc>, window_params = [{transform_indices = @transform_0, window_bounds = array<i64: 1, 16, 128>}, {pipeline_mode = #tpu.pipeline_mode<synchronous>, transform_indices = @transform_1, window_bounds = array<i64: 16, 4>}, {transform_indices = @transform_2, window_bounds = array<i64: 1, 16, 128>}]} {
    %c0 = arith.constant 0 : index
    %c0_0 = arith.constant 0 : index
    %c0_1 = arith.constant 0 : index
    %0 = vector.load %arg1[%c0, %c0_0, %c0_1] : memref<1x16x128xf32, #tpu.memory_space<vmem>>, vector<1x16x128xf32>
    %c0_2 = arith.constant 0 : index
    %c0_3 = arith.constant 0 : index
    %1 = vector.load %arg2[%c0_2, %c0_3] : memref<16x4xf32, #tpu.memory_space<vmem>>, vector<16x4xf32>
    %2 = vector.extract_strided_slice %1 {offsets = [0, 0], sizes = [16, 1], strides = [1, 1]} : vector<16x4xf32> to vector<16x1xf32>
    %3 = vector.shape_cast %2 : vector<16x1xf32> to vector<1x16x1xf32>
    %4 = vector.extract_strided_slice %1 {offsets = [0, 1], sizes = [16, 1], strides = [1, 1]} : vector<16x4xf32> to vector<16x1xf32>
    %5 = vector.shape_cast %4 : vector<16x1xf32> to vector<1x16x1xf32>
    %6 = vector.extract_strided_slice %1 {offsets = [0, 2], sizes = [16, 1], strides = [1, 1]} : vector<16x4xf32> to vector<16x1xf32>
    %7 = vector.shape_cast %6 : vector<16x1xf32> to vector<1x16x1xf32>
    %8 = vector.extract_strided_slice %1 {offsets = [0, 3], sizes = [16, 1], strides = [1, 1]} : vector<16x4xf32> to vector<16x1xf32>
    %9 = vector.shape_cast %8 : vector<16x1xf32> to vector<1x16x1xf32>
    %c1_i32 = arith.constant 1 : i32
    %10 = tpu.dynamic_rotate %0 by %c1_i32 dim 2 : vector<1x16x128xf32>, i32 -> vector<1x16x128xf32>
    %11 = vector.broadcast %3 : vector<1x16x1xf32> to vector<1x16x128xf32>
    %12 = arith.mulf %11, %10 : vector<1x16x128xf32>
    %13 = vector.broadcast %5 : vector<1x16x1xf32> to vector<1x16x128xf32>
    %14 = arith.mulf %13, %0 : vector<1x16x128xf32>
    %15 = arith.addf %12, %14 : vector<1x16x128xf32>
    %c127_i32 = arith.constant 127 : i32
    %16 = tpu.dynamic_rotate %0 by %c127_i32 dim 2 : vector<1x16x128xf32>, i32 -> vector<1x16x128xf32>
    %17 = vector.broadcast %7 : vector<1x16x1xf32> to vector<1x16x128xf32>
    %18 = arith.mulf %17, %16 : vector<1x16x128xf32>
    %19 = arith.addf %15, %18 : vector<1x16x128xf32>
    %20 = vector.broadcast %9 : vector<1x16x1xf32> to vector<1x16x128xf32>
    %21 = arith.addf %19, %20 : vector<1x16x128xf32>
    %22 = vector.extract_strided_slice %21 {offsets = [0, 0, 0], sizes = [1, 16, 1], strides = [1, 1, 1]} : vector<1x16x128xf32> to vector<1x16x1xf32>
    %23 = vector.extract_strided_slice %0 {offsets = [0, 0, 127], sizes = [1, 16, 1], strides = [1, 1, 1]} : vector<1x16x128xf32> to vector<1x16x1xf32>
    %24 = arith.mulf %3, %23 : vector<1x16x1xf32>
    %25 = arith.subf %22, %24 : vector<1x16x1xf32>
    %26 = vector.extract_strided_slice %21 {offsets = [0, 0, 127], sizes = [1, 16, 1], strides = [1, 1, 1]} : vector<1x16x128xf32> to vector<1x16x1xf32>
    %27 = vector.extract_strided_slice %0 {offsets = [0, 0, 0], sizes = [1, 16, 1], strides = [1, 1, 1]} : vector<1x16x128xf32> to vector<1x16x1xf32>
    %28 = arith.mulf %7, %27 : vector<1x16x1xf32>
    %29 = arith.subf %26, %28 : vector<1x16x1xf32>
    %c0_4 = arith.constant 0 : index
    %c0_5 = arith.constant 0 : index
    %c0_6 = arith.constant 0 : index
    %30 = vector.load %arg3[%c0_4, %c0_5, %c0_6] : memref<1x16x128xf32, #tpu.memory_space<vmem>>, vector<1x16x128xf32>
    tpu.vector_store %arg3[%c0_4, %c0_5, %c0_6], %21 {strides = array<i32>} : memref<1x16x128xf32, #tpu.memory_space<vmem>>, vector<1x16x128xf32>,
    %c0_7 = arith.constant 0 : index
    %c0_8 = arith.constant 0 : index
    %c0_9 = arith.constant 0 : index
    %31 = vector.load %arg3[%c0_7, %c0_8, %c0_9] : memref<1x16x128xf32, #tpu.memory_space<vmem>>, vector<1x16x1xf32>
    tpu.vector_store %arg3[%c0_7, %c0_8, %c0_9], %25 {strides = array<i32>} : memref<1x16x128xf32, #tpu.memory_space<vmem>>, vector<1x16x1xf32>,
    %c0_10 = arith.constant 0 : index
    %c0_11 = arith.constant 0 : index
    %c127 = arith.constant 127 : index
    %32 = vector.load %arg3[%c0_10, %c0_11, %c127] : memref<1x16x128xf32, #tpu.memory_space<vmem>>, vector<1x16x1xf32>
    tpu.vector_store %arg3[%c0_10, %c0_11, %c127], %29 {strides = array<i32>} : memref<1x16x128xf32, #tpu.memory_space<vmem>>, vector<1x16x1xf32>,
    return
  }
  func.func @transform_0(%arg0: i32) -> (i32, i32, i32) {
    %c0_i32 = arith.constant 0 : i32
    %c0_i32_0 = arith.constant 0 : i32
    %c0_i32_1 = arith.constant 0 : i32
    return %arg0, %c0_i32, %c0_i32_0 : i32, i32, i32
  }
  func.func @transform_1(%arg0: i32) -> (i32, i32) {
    %c0_i32 = arith.constant 0 : i32
    %c0_i32_0 = arith.constant 0 : i32
    %c0_i32_1 = arith.constant 0 : i32
    return %c0_i32, %c0_i32_0 : i32, i32
  }
  func.func @transform_2(%arg0: i32) -> (i32, i32, i32) {
    %c0_i32 = arith.constant 0 : i32
    %c0_i32_0 = arith.constant 0 : i32
    %c0_i32_1 = arith.constant 0 : i32
    return %arg0, %c0_i32, %c0_i32_0 : i32, i32, i32
  }
}

</mosaic_0001>

<llo_original>
// kernel: tpu_custom_call.1
$region0: #{tpu_custom_call.1}
  #allocation0 [shape = 'u32[]', space=smem, size = 0x4, offset = 0x4, fixed_abs, tag = 'smem constant byte address 0x4 - core index']
  #allocation1 [shape = 'u32[144,128]{1,0:T(1,128)}', space=vmem, size = 0x12000, scoped, tag = 'internal scratch']
  %s0 = inlined_call_operand.hbm [shape: f32[2,16,128], index: 0, kind: input, shape index: {}]
  %s1 = inlined_call_operand.vmem [shape: f32[16,4], index: 1, kind: input, shape index: {}]
  %s2 = inlined_call_operand.hbm [shape: f32[2,16,128], index: 2, kind: output, shape index: {}]
  %s3 = sld [smem:[#allocation0]]
  $region45: #{tpu_custom_call.1} parent=0
    _
  %s5 = ssub.s32 1, %s3
  %s6 = scalar_select 0, %s5, %s3
  $region1: #{tpu_custom_call.1} parent=0
    #allocation2 [shape = 'u8[16384]{0}', space=vmem, size = 0x4000, scoped, tag = 'input window, operand 0']
    #allocation3 [shape = 's32[2]{0}', space=sflag, size = 0x8, scoped, tag = 'scoped memory for tpu_custom_call.1']
    #allocation4 [shape = 's32[2]{0}', space=sflag, size = 0x8, scoped, tag = 'scoped memory for tpu_custom_call.1']
    #allocation5 [shape = 'u8[16384]{0}', space=vmem, size = 0x4000, scoped, tag = 'output window, operand 0']
    %7 = vsyncpa [#allocation3], 0
    %s8 = scalar_lea.sflag [#allocation3], 1
    %9 = vsyncpa %s8, 0
    %10 = vsyncpa [#allocation4], 0
    %s11 = scalar_lea.sflag [#allocation4], 1
    %12 = vsyncpa %s11, 0
    loop: start=0, step=1, limit=4
    $region2: #{tpu_custom_call.1} parent=1 // loop_pre_header
      _
    $region3: #{tpu_custom_call.1} parent=1 // loop_header
      %s14 = sphi 0, %s18
      %p15 = scmp.ge.s32.totalorder %s14, 4
      %s24 = sphi 0, %s26
      %s27 = sphi 0, %s24
      %s28 = sphi 0, %s27
      %s44 = sphi 0, %s28
      %s48 = sphi 0, %s48
      %s50 = sphi 0, %s48
      %s51 = sphi 0, %s50
      %s65 = sphi 0, %s51
      %s71 = sphi 0, %s73
      %s74 = sphi 0, %s71
      %s75 = sphi 0, %s74
      %s91 = sphi 0, %s75
    $region4: #{tpu_custom_call.1} parent=1 // loop_header_branch
      %17 = sbr.rel (%p15) target = $region8
    $region5: #{tpu_custom_call.1} parent=1 // loop_body
      %s19 = ssub.s32 %s14, 1
      %s20 = ssub.s32 %s14, 2
      %s21 = sadd.s32 %s14, 1
      %s22 = ssub.s32 %s14, %s21
      %p23 = scmp.eq.s32.totalorder %s22, 0
      %s25 = sadd.s32 %s24, 1
      %s26 = scalar_select %p23, %s24, %s25
      %p29 = pneg %p23
      %p30 = scmp.eq.s32.totalorder %s14, 1
      %p31 = por %p29, %p30
      %p32 = scmp.ne.s32.totalorder %s24, %s27
      %p33 = scmp.eq.s32.totalorder %s14, 0
      %p34 = por %p32, %p33
      %p35 = scmp.ne.s32.totalorder %s24, %s27
      %p36 = scmp.eq.s32.totalorder %s19, 1
      %p37 = por %p35, %p36
      %p38 = scmp.ne.s32.totalorder %s27, %s28
      %p39 = scmp.eq.s32.totalorder %s19, 0
      %p40 = por %p38, %p39
      %p41 = scmp.ne.s32.totalorder %s27, %s28
      %p42 = scmp.eq.s32.totalorder %s20, 1
      %p43 = por %p41, %p42
      %p45 = scmp.ne.s32.totalorder %s28, %s44
      %p46 = scmp.eq.s32.totalorder %s20, 0
      %p47 = por %p45, %p46
      %s49 = sadd.s32 %s48, 1
      %p52 = scmp.eq.s32.totalorder %s14, 1
      %p53 = scmp.ne.s32.totalorder %s48, %s50
      %p54 = scmp.eq.s32.totalorder %s14, 0
      %p55 = por %p53, %p54
      %p56 = scmp.ne.s32.totalorder %s48, %s50
      %p57 = scmp.eq.s32.totalorder %s19, 1
      %p58 = por %p56, %p57
      %p59 = scmp.ne.s32.totalorder %s50, %s51
      %p60 = scmp.eq.s32.totalorder %s19, 0
      %p61 = por %p59, %p60
      %p62 = scmp.ne.s32.totalorder %s50, %s51
      %p63 = scmp.eq.s32.totalorder %s20, 1
      %p64 = por %p62, %p63
      %p66 = scmp.ne.s32.totalorder %s51, %s65
      %p67 = scmp.eq.s32.totalorder %s20, 0
      %p68 = por %p66, %p67
      %s69 = ssub.s32 %s14, %s21
      %p70 = scmp.eq.s32.totalorder %s69, 0
      %s72 = sadd.s32 %s71, 1
      %s73 = scalar_select %p70, %s71, %s72
      %p76 = pneg %p70
      %p77 = scmp.eq.s32.totalorder %s14, 1
      %p78 = por %p76, %p77
      %p79 = scmp.ne.s32.totalorder %s71, %s74
      %p80 = scmp.eq.s32.totalorder %s14, 0
      %p81 = por %p79, %p80
      %p82 = scmp.ne.s32.totalorder %s71, %s74
      %p83 = scmp.eq.s32.totalorder %s19, 1
      %p84 = por %p82, %p83
      %p85 = scmp.ne.s32.totalorder %s74, %s75
      %p86 = scmp.eq.s32.totalorder %s19, 0
      %p87 = por %p85, %p86
      %p88 = scmp.ne.s32.totalorder %s74, %s75
      %p89 = scmp.eq.s32.totalorder %s20, 1
      %p90 = por %p88, %p89
      %p92 = scmp.ne.s32.totalorder %s75, %s91
      %p93 = scmp.eq.s32.totalorder %s20, 0
      %p94 = por %p92, %p93
      %p95 = scmp.le.s32.totalorder 1, %s14
      %p96 = scmp.lt.s32.totalorder %s14, 3
      %p97 = pnand %p95, %p96
      %p98 = pneg %p97
      // Predicated region
      $region9: #{tpu_custom_call.1} parent=5 // pred_check
        _
      $region10: #{tpu_custom_call.1} parent=5 // pred_check_branch
        %100 = sbr.rel (%p97) target = $region12
      $region11: #{tpu_custom_call.1} parent=5 // pred_region
        %s101 = ssub.s32 %s14, 1
        // Predicated region
        $region13: #{tpu_custom_call.1} parent=11 // pred_check
          %p102 = pneg %p61
        $region14: #{tpu_custom_call.1} parent=11 // pred_check_branch
          %104 = sbr.rel (%p102) target = $region16
        $region15: #{tpu_custom_call.1} parent=11 // pred_region
          _
        $region16: #{tpu_custom_call.1} parent=11 // pred_fallthru
          _
      $region12: #{tpu_custom_call.1} parent=5 // pred_fallthru
        _
      %p105 = scmp.lt.s32.totalorder %s14, 2
      // Predicated region
      $region17: #{tpu_custom_call.1} parent=5 // pred_check
        %p106 = pneg %p105
      $region18: #{tpu_custom_call.1} parent=5 // pred_check_branch
        %108 = sbr.rel (%p106) target = $region20
      $region19: #{tpu_custom_call.1} parent=5 // pred_region
        // Predicated region
        $region21: #{tpu_custom_call.1} parent=19 // pred_check
          %p109 = pneg %p34
        $region22: #{tpu_custom_call.1} parent=19 // pred_check_branch
          %111 = sbr.rel (%p109) target = $region24
        $region23: #{tpu_custom_call.1} parent=19 // pred_region
          %s112 = sand.u32 %s24, 1
          %s113 = scalar_lea.sflag [#allocation3], %s112
          %s114 = sand.u32 %s24, 1
          %s115 = smul.addr %s114, 16
          %s116 = scalar_lea.vmem [#allocation2], %s115
          %s118 = ssub.s32 256, 256
          %119 = vsyncadd %s113, %s118
          %s120 = smul.addr %s14, 2
          %s121 = smul.addr %s120, 128
          %s122 = scalar_lea.hbm %s0, %s121
          %s123 = sshll.u32 %s116, 4
          %s124 = int_to_ptr.vmem [resolvable:$true] %s123
          %129 = dma.hbm_to_vmem [thread:$0]  %s122, 256, %s124, %s113, 128, 128, 8
        $region24: #{tpu_custom_call.1} parent=19 // pred_fallthru
          _
      $region20: #{tpu_custom_call.1} parent=5 // pred_fallthru
        _
      %p130 = scmp.le.s32.totalorder 1, %s14
      %p131 = scmp.lt.s32.totalorder %s14, 3
      %p132 = pnand %p130, %p131
      %p133 = pneg %p132
      // Predicated region
      $region25: #{tpu_custom_call.1} parent=5 // pred_check
        _
      $region26: #{tpu_custom_call.1} parent=5 // pred_check_branch
        %135 = sbr.rel (%p132) target = $region28
      $region27: #{tpu_custom_call.1} parent=5 // pred_region
        %s136 = ssub.s32 %s14, 1
        %s137 = sand.u32 %s27, 1
        %s138 = scalar_lea.sflag [#allocation3], %s137
        %s139 = sand.u32 %s27, 1
        %s140 = smul.addr %s139, 16
        %s141 = scalar_lea.vmem [#allocation2], %s140
        // Predicated region
        $region29: #{tpu_custom_call.1} parent=27 // pred_check
          %p142 = pneg %p40
        $region30: #{tpu_custom_call.1} parent=27 // pred_check_branch
          %144 = sbr.rel (%p142) target = $region32
        $region31: #{tpu_custom_call.1} parent=27 // pred_region
          %145 = dma.done %s138, 256
        $region32: #{tpu_custom_call.1} parent=27 // pred_fallthru
          _
        %s146 = sand.u32 %s27, 1
        %s147 = scalar_lea.sflag [#allocation3], %s146
        %s148 = sand.u32 %s27, 1
        %s149 = smul.addr %s148, 16
        %s150 = scalar_lea.vmem [#allocation2], %s149
        %p151 = pneg %p40
        %p152 = pneg %p37
        %p153 = pneg %p61
        %p154 = pneg %p58
        %p155 = pneg %p87
        %p156 = pneg %p84
        %s157 = sand.u32 %s74, 1
        %s158 = scalar_lea.sflag [#allocation4], %s157
        %s159 = sand.u32 %s74, 1
        %s160 = smul.addr %s159, 16
        %s161 = scalar_lea.vmem [#allocation5], %s160
        %v162 = vld [vmem:[%s141] sm:$0xff]
        %v163 = vld [vmem:[%s141 + $0x8] sm:$0xff]
        %v164 = vld [vmem:[%s1] sm:$0xff]
        %v165 = vld [vmem:[%s1 + $0x8] sm:$0xff]
        %166 = vrot.lane.b32.xlu0 %v162, 1
        %v167 = vpop.permute.xlu0 %166
        %168 = vrot.lane.b32.xlu0 %v163, 1
        %v169 = vpop.permute.xlu0 %168
        %171 = vset.pattern.permute.xlu0 0
        %172 = vperm.xlu0 %171, %v164
        %v173 = vpop.permute.xlu0 %172
        %176 = vset.pattern.permute.xlu0 0
        %177 = vperm.xlu0 %176, %v165
        %v178 = vpop.permute.xlu0 %177
        %v180 = vmul.f32 %v173, %v167
        %v181 = vmul.f32 %v178, %v169
        %182 = vset.pattern.permute.xlu0 1
        %183 = vperm.xlu0 %182, %v164
        %v184 = vpop.permute.xlu0 %183
        %186 = vset.pattern.permute.xlu0 1
        %187 = vperm.xlu0 %186, %v165
        %v188 = vpop.permute.xlu0 %187
        %v190 = vmul.f32 %v184, %v162
        %v191 = vmul.f32 %v188, %v163
        %v192 = vadd.f32 %v180, %v190
        %v193 = vadd.f32 %v181, %v191
        %194 = vrot.lane.b32.xlu0 %v162, 127
        %v195 = vpop.permute.xlu0 %194
        %196 = vrot.lane.b32.xlu0 %v163, 127
        %v197 = vpop.permute.xlu0 %196
        %198 = vset.pattern.permute.xlu0 2
        %199 = vperm.xlu0 %198, %v164
        %v200 = vpop.permute.xlu0 %199
        %202 = vset.pattern.permute.xlu0 2
        %203 = vperm.xlu0 %202, %v165
        %v204 = vpop.permute.xlu0 %203
        %v206 = vmul.f32 %v200, %v195
        %v207 = vmul.f32 %v204, %v197
        %v208 = vadd.f32 %v192, %v206
        %v209 = vadd.f32 %v193, %v207
        %210 = vset.pattern.permute.xlu0 3
        %211 = vperm.xlu0 %210, %v164
        %v212 = vpop.permute.xlu0 %211
        %214 = vset.pattern.permute.xlu0 3
        %215 = vperm.xlu0 %214, %v165
        %v216 = vpop.permute.xlu0 %215
        %v218 = vadd.f32 %v208, %v212
        %v219 = vadd.f32 %v209, %v216
        %222 = vrot.lane.b32.xlu0 %v162, 1
        %v223 = vpop.permute.xlu0 %222
        %224 = vrot.lane.b32.xlu0 %v163, 1
        %v225 = vpop.permute.xlu0 %224
        %v228 = vmul.f32 %v164, %v223
        %v229 = vmul.f32 %v165, %v225
        %v230 = vsub.f32 %v218, %v228
        %v231 = vsub.f32 %v219, %v229
        %232 = vrot.lane.b32.xlu0 %v162, 2
        %v233 = vpop.permute.xlu0 %232
        %234 = vrot.lane.b32.xlu0 %v163, 2
        %v235 = vpop.permute.xlu0 %234
        %v238 = vmul.f32 %v164, %v233
        %v239 = vmul.f32 %v165, %v235
        %242 = vrot.lane.b32.xlu0 %v238, 125
        %v243 = vpop.permute.xlu0 %242
        %244 = vrot.lane.b32.xlu0 %v239, 125
        %v245 = vpop.permute.xlu0 %244
        %v248 = vsub.f32 %v218, %v243
        %v249 = vsub.f32 %v219, %v245
        %250 = vst [vmem:[%s161] sm:$0xff] %v218
        %251 = vst [vmem:[%s161 + $0x8] sm:$0xff] %v219
        %vm252 = vcmask 7168
        %253 = vst.msk [vmem:[%s161] sm:$0xff] %vm252, %v230
        %254 = vst.msk [vmem:[%s161 + $0x8] sm:$0xff] %vm252, %v231
        %vm255 = vcmask 1048568
        %256 = vst.msk [vmem:[%s161] sm:$0xff] %vm255, %v248
        %257 = vst.msk [vmem:[%s161 + $0x8] sm:$0xff] %vm255, %v249
        %s258 = sand.u32 %s74, 1
        %s259 = scalar_lea.sflag [#allocation4], %s258
        %s260 = sand.u32 %s74, 1
        %s261 = smul.addr %s260, 16
        %s262 = scalar_lea.vmem [#allocation5], %s261
        // Predicated region
        $region33: #{tpu_custom_call.1} parent=27 // pred_check
          %p263 = pneg %p84
        $region34: #{tpu_custom_call.1} parent=27 // pred_check_branch
          %265 = sbr.rel (%p263) target = $region36
        $region35: #{tpu_custom_call.1} parent=27 // pred_region
          %s267 = ssub.s32 256, 256
          %268 = vsyncadd %s259, %s267
          %s269 = smul.addr %s19, 2
          %s270 = smul.addr %s269, 128
          %s271 = scalar_lea.hbm %s2, %s270
          %s272 = sshll.u32 %s262, 4
          %s273 = int_to_ptr.vmem [resolvable:$true] %s272
          %278 = dma.vmem_to_hbm [thread:$0]  %s273, 256, %s271, %s259, 128, 128, 8
        $region36: #{tpu_custom_call.1} parent=27 // pred_fallthru
          _
      $region28: #{tpu_custom_call.1} parent=5 // pred_fallthru
        _
      %p279 = scmp.le.s32.totalorder 2, %s14
      // Predicated region
      $region37: #{tpu_custom_call.1} parent=5 // pred_check
        %p280 = pneg %p279
      $region38: #{tpu_custom_call.1} parent=5 // pred_check_branch
        %282 = sbr.rel (%p280) target = $region40
      $region39: #{tpu_custom_call.1} parent=5 // pred_region
        %s283 = ssub.s32 %s14, 2
        // Predicated region
        $region41: #{tpu_custom_call.1} parent=39 // pred_check
          %p284 = pneg %p90
        $region42: #{tpu_custom_call.1} parent=39 // pred_check_branch
          %286 = sbr.rel (%p284) target = $region44
        $region43: #{tpu_custom_call.1} parent=39 // pred_region
          %s287 = sand.u32 %s75, 1
          %s288 = scalar_lea.sflag [#allocation4], %s287
          %s289 = sand.u32 %s75, 1
          %s290 = smul.addr %s289, 16
          %s291 = scalar_lea.vmem [#allocation5], %s290
          %292 = dma.done %s288, 256
        $region44: #{tpu_custom_call.1} parent=39 // pred_fallthru
          _
      $region40: #{tpu_custom_call.1} parent=5 // pred_fallthru
        _
    $region6: #{tpu_custom_call.1} parent=1 // loop_footer
      %s18 = sadd.s32 1, %s14
    $region7: #{tpu_custom_call.1} parent=1 // loop_footer_branch
      %13 = sbr.rel target = $region3
    $region8: #{tpu_custom_call.1} parent=1 // loop_exit
      _
    %293 = vsyncpa [#allocation3], 1
    %s294 = scalar_lea.sflag [#allocation3], 1
    %295 = vsyncpa %s294, 1
    %296 = vsyncpa [#allocation4], 1
    %s297 = scalar_lea.sflag [#allocation4], 1
    %298 = vsyncpa %s297, 1

</llo_original>
